<compile_context>
chip_gen: v5e
topology: v5e:2x2
jax: 0.10.0
libtpu: 0.0.40
codegen_flags: <defaults>
</compile_context>

<pallas_src>
import functools

import jax
import jax.numpy as jnp
from jax.experimental import pallas as pl
from jax.experimental.pallas import tpu as pltpu

N_STATES = 2
N_ACTIONS = 1  # kernel's reduction epilogue assumes N_ACTIONS == 1


def net_kernel(x_ref, w1_ref, b1_ref, w2_ref, b2_ref, o_ref):
    # x_ref : (N_STATES, TB)   activations, batch on lanes
    # w1_ref: (units, N_STATES) fc1.weight (PyTorch layout)
    # b1_ref: (units, 1)        fc1.bias as a column
    # w2_ref: (units, 1)        out.weight transposed to a column
    # b2_ref: (1, 1) in SMEM    out.bias scalar
    # o_ref : (N_ACTIONS, TB)
    xt = x_ref[...]
    w1 = w1_ref[...]

    # Layer 1 as broadcast multiply-adds (VPU) -- no MXU for a K=2 contraction.
    # h[u, b] = sum_s w1[u, s] * x[s, b] + b1[u]
    h = w1[:, 0:1] * xt[0:1, :]
    for s in range(1, N_STATES):
        h = h + w1[:, s:s + 1] * xt[s:s + 1, :]
    h = h + b1_ref[...]

    # leaky_relu, negative_slope = 0.01
    h = jnp.where(h >= 0.0, h, 0.01 * h)

    # Layer 2 (N_ACTIONS == 1): VPU multiply + sublane reduction, bias from SMEM.
    out = jnp.sum(h * w2_ref[...], axis=0, keepdims=True) + b2_ref[0, 0]
    o_ref[...] = out.astype(o_ref.dtype)


@functools.partial(jax.jit, static_argnames=("block_b",))
def net_forward(x, w1, b1, w2, b2, *, block_b=512):
    """Forward pass of Net.

    x : (B, N_STATES) float32
    w1: (units, N_STATES)  -- fc1.weight     b1: (units,)  -- fc1.bias
    w2: (N_ACTIONS, units) -- out.weight     b2: (N_ACTIONS,) -- out.bias
    returns (B, N_ACTIONS) float32
    """
    B = x.shape[0]
    units = w1.shape[0]

    # Lane-dense layout: batch on the last (lane) axis. Transposes/reshapes are
    # done in the wrapper where XLA fuses them for free.
    xt = jnp.transpose(x)                       # (N_STATES, B)
    b1c = b1.reshape(units, 1)                  # (units, 1)
    w2c = jnp.transpose(w2.reshape(N_ACTIONS, units))  # (units, 1)
    b2s = b2.reshape(1, 1)                      # (1, 1) scalar for SMEM

    # Tile the batch so BlockSpec pipelining has something to overlap and the
    # grid can shard across TensorCores; small batches run as a single block.
    if B <= block_b:
        tb = B
        b_padded = B
    else:
        tb = block_b
        b_padded = pl.cdiv(B, tb) * tb
        if b_padded != B:
            xt = jnp.pad(xt, ((0, 0), (0, b_padded - B)))
    grid = (b_padded // tb,)

    out_t = pl.pallas_call(
        net_kernel,
        out_shape=jax.ShapeDtypeStruct((N_ACTIONS, b_padded), jnp.float32),
        grid=grid,
        in_specs=[
            pl.BlockSpec((N_STATES, tb), lambda i: (0, i)),       # x (streamed)
            pl.BlockSpec((units, N_STATES), lambda i: (0, 0)),    # w1 (resident)
            pl.BlockSpec((units, 1), lambda i: (0, 0)),           # b1 (resident)
            pl.BlockSpec((units, 1), lambda i: (0, 0)),           # w2 (resident)
            pl.BlockSpec(memory_space=pltpu.MemorySpace.SMEM),    # b2 scalar
        ],
        out_specs=pl.BlockSpec((N_ACTIONS, tb), lambda i: (0, i)),
        compiler_params=pltpu.CompilerParams(
            dimension_semantics=("parallel",),
        ),
    )(xt, w1, b1c, w2c, b2s)

    # Back to the module's (B, N_ACTIONS) convention; drop batch padding.
    return jnp.transpose(out_t[:, :B])


def reference_forward(x, w1, b1, w2, b2):
    h = x @ w1.T + b1
    h = jnp.where(h >= 0.0, h, 0.01 * h)
    return h @ w2.T + b2


if __name__ == "__main__":
    units = 32
    batch = 8

    key = jax.random.PRNGKey(0)
    k_x, k_w1, k_b1, k_w2, k_b2, k_x2 = jax.random.split(key, 6)

    # Parameters mirror the module's normal_(0, 0.1) init, PyTorch layouts.
    x = jax.random.normal(k_x, (batch, N_STATES), dtype=jnp.float32)
    w1 = 0.1 * jax.random.normal(k_w1, (units, N_STATES), dtype=jnp.float32)
    b1 = 0.1 * jax.random.normal(k_b1, (units,), dtype=jnp.float32)
    w2 = 0.1 * jax.random.normal(k_w2, (N_ACTIONS, units), dtype=jnp.float32)
    b2 = 0.1 * jax.random.normal(k_b2, (N_ACTIONS,), dtype=jnp.float32)

    # Small-batch path (single block).
    out = jax.block_until_ready(net_forward(x, w1, b1, w2, b2))
    ref = reference_forward(x, w1, b1, w2, b2)
    assert out.shape == (batch, N_ACTIONS)
    assert jnp.allclose(out, ref, atol=1e-5, rtol=1e-5)

    # Large-batch path (tiled grid + padding), e.g. a CEM population in one call.
    big_batch = 1000
    xb = jax.random.normal(k_x2, (big_batch, N_STATES), dtype=jnp.float32)
    out_b = jax.block_until_ready(net_forward(xb, w1, b1, w2, b2))
    ref_b = reference_forward(xb, w1, b1, w2, b2)
    assert out_b.shape == (big_batch, N_ACTIONS)
    assert jnp.allclose(out_b, ref_b, atol=1e-5, rtol=1e-5)

    print("KERNEL_OK")
</pallas_src>

<mosaic_0001>
module attributes {stable_mosaic.version = 11 : i64} {
  func.func @net_kernel(%arg0: i32, %arg1: memref<2x8xf32, #tpu.memory_space<vmem>>, %arg2: memref<32x2xf32, #tpu.memory_space<vmem>>, %arg3: memref<32x1xf32, #tpu.memory_space<vmem>>, %arg4: memref<32x1xf32, #tpu.memory_space<vmem>>, %arg5: memref<1x1xf32, #tpu.memory_space<smem>>, %arg6: memref<1x8xf32, #tpu.memory_space<vmem>>) attributes {dimension_semantics = [#tpu.dimension_semantics<parallel>], iteration_bounds = array<i64: 1>, scalar_prefetch = 0 : i64, scratch_operands = 0 : i64, tpu.core_type = #tpu.core_type<tc>, window_params = [{transform_indices = @transform_0, window_bounds = array<i64: 2, 8>}, {pipeline_mode = #tpu.pipeline_mode<synchronous>, transform_indices = @transform_1, window_bounds = array<i64: 32, 2>}, {pipeline_mode = #tpu.pipeline_mode<synchronous>, transform_indices = @transform_2, window_bounds = array<i64: 32, 1>}, {pipeline_mode = #tpu.pipeline_mode<synchronous>, transform_indices = @transform_3, window_bounds = array<i64: 32, 1>}, {transform_indices = @transform_4, window_bounds = array<i64: 1, 1>}, {transform_indices = @transform_5, window_bounds = array<i64: 1, 8>}]} {
    %c0 = arith.constant 0 : index
    %c0_0 = arith.constant 0 : index
    %0 = vector.load %arg1[%c0, %c0_0] : memref<2x8xf32, #tpu.memory_space<vmem>>, vector<2x8xf32>
    %c0_1 = arith.constant 0 : index
    %c0_2 = arith.constant 0 : index
    %1 = vector.load %arg2[%c0_1, %c0_2] : memref<32x2xf32, #tpu.memory_space<vmem>>, vector<32x2xf32>
    %2 = vector.extract_strided_slice %1 {offsets = [0, 0], sizes = [32, 1], strides = [1, 1]} : vector<32x2xf32> to vector<32x1xf32>
    %3 = vector.extract_strided_slice %0 {offsets = [0, 0], sizes = [1, 8], strides = [1, 1]} : vector<2x8xf32> to vector<1x8xf32>
    %4 = vector.broadcast %2 : vector<32x1xf32> to vector<32x8xf32>
    %5 = vector.broadcast %3 : vector<1x8xf32> to vector<32x8xf32>
    %6 = arith.mulf %4, %5 : vector<32x8xf32>
    %7 = vector.extract_strided_slice %1 {offsets = [0, 1], sizes = [32, 1], strides = [1, 1]} : vector<32x2xf32> to vector<32x1xf32>
    %8 = vector.extract_strided_slice %0 {offsets = [1, 0], sizes = [1, 8], strides = [1, 1]} : vector<2x8xf32> to vector<1x8xf32>
    %9 = vector.broadcast %7 : vector<32x1xf32> to vector<32x8xf32>
    %10 = vector.broadcast %8 : vector<1x8xf32> to vector<32x8xf32>
    %11 = arith.mulf %9, %10 : vector<32x8xf32>
    %12 = arith.addf %6, %11 : vector<32x8xf32>
    %c0_3 = arith.constant 0 : index
    %c0_4 = arith.constant 0 : index
    %13 = vector.load %arg3[%c0_3, %c0_4] : memref<32x1xf32, #tpu.memory_space<vmem>>, vector<32x1xf32>
    %14 = vector.broadcast %13 : vector<32x1xf32> to vector<32x8xf32>
    %15 = arith.addf %12, %14 : vector<32x8xf32>
    %cst = arith.constant 0.000000e+00 : f32
    %16 = vector.broadcast %cst : f32 to vector<32x8xf32>
    %17 = arith.cmpf oge, %15, %16 : vector<32x8xf32>
    %cst_5 = arith.constant 0.00999999977 : f32
    %18 = vector.broadcast %cst_5 : f32 to vector<32x8xf32>
    %19 = arith.mulf %18, %15 : vector<32x8xf32>
    %20 = arith.select %17, %15, %19 : vector<32x8xi1>, vector<32x8xf32>
    %c0_6 = arith.constant 0 : index
    %c0_7 = arith.constant 0 : index
    %21 = vector.load %arg4[%c0_6, %c0_7] : memref<32x1xf32, #tpu.memory_space<vmem>>, vector<32x1xf32>
    %22 = vector.broadcast %21 : vector<32x1xf32> to vector<32x8xf32>
    %23 = arith.mulf %20, %22 : vector<32x8xf32>
    %cst_8 = arith.constant dense<0.000000e+00> : vector<8xf32>
    %24 = vector.multi_reduction <add>, %23, %cst_8 [0] : vector<32x8xf32> to vector<8xf32>
    %25 = vector.shape_cast %24 : vector<8xf32> to vector<1x8xf32>
    %c0_9 = arith.constant 0 : index
    %c0_10 = arith.constant 0 : index
    %26 = memref.load %arg5[%c0_9, %c0_10] : memref<1x1xf32, #tpu.memory_space<smem>>
    %27 = vector.broadcast %26 : f32 to vector<1x8xf32>
    %28 = arith.addf %25, %27 : vector<1x8xf32>
    %c0_11 = arith.constant 0 : index
    %c0_12 = arith.constant 0 : index
    %29 = vector.load %arg6[%c0_11, %c0_12] : memref<1x8xf32, #tpu.memory_space<vmem>>, vector<1x8xf32>
    tpu.vector_store %arg6[%c0_11, %c0_12], %28 {strides = array<i32>} : memref<1x8xf32, #tpu.memory_space<vmem>>, vector<1x8xf32>,
    return
  }
  func.func @transform_0(%arg0: i32) -> (i32, i32) {
    %c0_i32 = arith.constant 0 : i32
    %c0_i32_0 = arith.constant 0 : i32
    return %c0_i32, %arg0 : i32, i32
  }
  func.func @transform_1(%arg0: i32) -> (i32, i32) {
    %c0_i32 = arith.constant 0 : i32
    %c0_i32_0 = arith.constant 0 : i32
    %c0_i32_1 = arith.constant 0 : i32
    return %c0_i32, %c0_i32_0 : i32, i32
  }
  func.func @transform_2(%arg0: i32) -> (i32, i32) {
    %c0_i32 = arith.constant 0 : i32
    %c0_i32_0 = arith.constant 0 : i32
    %c0_i32_1 = arith.constant 0 : i32
    return %c0_i32, %c0_i32_0 : i32, i32
  }
  func.func @transform_3(%arg0: i32) -> (i32, i32) {
    %c0_i32 = arith.constant 0 : i32
    %c0_i32_0 = arith.constant 0 : i32
    %c0_i32_1 = arith.constant 0 : i32
    return %c0_i32, %c0_i32_0 : i32, i32
  }
  func.func @transform_4(%arg0: i32) -> (i32, i32) {
    %c0_i32 = arith.constant 0 : i32
    %c0_i32_0 = arith.constant 0 : i32
    %c0_i32_1 = arith.constant 0 : i32
    return %c0_i32, %c0_i32_0 : i32, i32
  }
  func.func @transform_5(%arg0: i32) -> (i32, i32) {
    %c0_i32 = arith.constant 0 : i32
    %c0_i32_0 = arith.constant 0 : i32
    return %c0_i32, %arg0 : i32, i32
  }
}

</mosaic_0001>

<llo_original>
// kernel: net_forward.1
$region0: #{net_forward.1}
  #allocation0 [shape = 'u32[]', space=smem, size = 0x4, offset = 0x4, fixed_abs, tag = 'smem constant byte address 0x4 - core index']
  #allocation1 [shape = 'u32[72,128]{1,0:T(1,128)}', space=vmem, size = 0x9000, scoped, tag = 'internal scratch']
  #allocation2 [shape = 'f32[1,1]{1,0:T(1,128)S(6)}', space=smem, size = 0x200, scoped, tag = 'scoped memory for net_forward.1']
  %s0 = inlined_call_operand.vmem [shape: f32[2,8], index: 0, kind: input, shape index: {}]
  %s1 = inlined_call_operand.vmem [shape: f32[32,2], index: 1, kind: input, shape index: {}]
  %s2 = inlined_call_operand.vmem [shape: f32[32,1], index: 2, kind: input, shape index: {}]
  %s3 = inlined_call_operand.vmem [shape: f32[32,1], index: 3, kind: input, shape index: {}]
  %s4 = inlined_call_operand.<no memory space> [shape: f32[1,1], index: 4, kind: input, shape index: {}]
  %s5 = inlined_call_operand.hbm [shape: f32[1,8], index: 5, kind: output, shape index: {}]
  %s6 = sld [smem:[#allocation0]]
  $region30: #{net_forward.1} parent=0
    _
  %s8 = ssub.s32 1, %s6
  %s9 = scalar_select 0, %s8, %s6
  %10 = sst [smem:[#allocation2]] %s4
  $region1: #{net_forward.1} parent=0
    #allocation3 [shape = 'u8[512]{0}', space=vmem, size = 0x400, scoped, tag = 'output window, operand 0, single buffered']
    #allocation4 [shape = 's32[1]{0}', space=sflag, size = 0x4, scoped, tag = 'scoped memory for net_forward.1']
    %11 = vsyncpa [#allocation4], 0
    // Predicated region
    $region2: #{net_forward.1} parent=1 // pred_check
      _
    $region3: #{net_forward.1} parent=1 // pred_check_branch
      %13 = sbr.rel (0) target = $region5
    $region4: #{net_forward.1} parent=1 // pred_region
      _
    $region5: #{net_forward.1} parent=1 // pred_fallthru
      _
    // Predicated region
    $region6: #{net_forward.1} parent=1 // pred_check
      _
    $region7: #{net_forward.1} parent=1 // pred_check_branch
      %15 = sbr.rel (0) target = $region9
    $region8: #{net_forward.1} parent=1 // pred_region
      _
    $region9: #{net_forward.1} parent=1 // pred_fallthru
      _
    // Predicated region
    $region10: #{net_forward.1} parent=1 // pred_check
      _
    $region11: #{net_forward.1} parent=1 // pred_check_branch
      %17 = sbr.rel (0) target = $region13
    $region12: #{net_forward.1} parent=1 // pred_region
      _
    $region13: #{net_forward.1} parent=1 // pred_fallthru
      _
    // Predicated region
    $region14: #{net_forward.1} parent=1 // pred_check
      _
    $region15: #{net_forward.1} parent=1 // pred_check_branch
      %19 = sbr.rel (0) target = $region17
    $region16: #{net_forward.1} parent=1 // pred_region
      _
    $region17: #{net_forward.1} parent=1 // pred_fallthru
      _
    // Predicated region
    $region18: #{net_forward.1} parent=1 // pred_check
      _
    $region19: #{net_forward.1} parent=1 // pred_check_branch
      %21 = sbr.rel (0) target = $region21
    $region20: #{net_forward.1} parent=1 // pred_region
      _
    $region21: #{net_forward.1} parent=1 // pred_fallthru
      _
    %v22 = vld [vmem:[%s0] sm:$0x3]
    %v23 = vld [vmem:[%s1] sm:$0xff]
    %v24 = vld [vmem:[%s1 + $0x8] sm:$0xff]
    %v25 = vld [vmem:[%s1 + $0x10] sm:$0xff]
    %v26 = vld [vmem:[%s1 + $0x18] sm:$0xff]
    %28 = vset.pattern.permute.xlu0 0
    %29 = vperm.xlu0 %28, %v23
    %v30 = vpop.permute.xlu0 %29
    %33 = vset.pattern.permute.xlu0 0
    %34 = vperm.xlu0 %33, %v24
    %v35 = vpop.permute.xlu0 %34
    %38 = vset.pattern.permute.xlu0 0
    %39 = vperm.xlu0 %38, %v25
    %v40 = vpop.permute.xlu0 %39
    %43 = vset.pattern.permute.xlu0 0
    %44 = vperm.xlu0 %43, %v26
    %v45 = vpop.permute.xlu0 %44
    %v47 = vperm.slane %v22, 0
    %v48 = vmul.f32 %v30, %v47
    %v49 = vmul.f32 %v35, %v47
    %v50 = vmul.f32 %v40, %v47
    %v51 = vmul.f32 %v45, %v47
    %52 = vset.pattern.permute.xlu0 1
    %53 = vperm.xlu0 %52, %v23
    %v54 = vpop.permute.xlu0 %53
    %56 = vset.pattern.permute.xlu0 1
    %57 = vperm.xlu0 %56, %v24
    %v58 = vpop.permute.xlu0 %57
    %60 = vset.pattern.permute.xlu0 1
    %61 = vperm.xlu0 %60, %v25
    %v62 = vpop.permute.xlu0 %61
    %64 = vset.pattern.permute.xlu0 1
    %65 = vperm.xlu0 %64, %v26
    %v66 = vpop.permute.xlu0 %65
    %v68 = vperm.slane %v22, 1
    %v69 = vmul.f32 %v54, %v68
    %v70 = vmul.f32 %v58, %v68
    %v71 = vmul.f32 %v62, %v68
    %v72 = vmul.f32 %v66, %v68
    %v73 = vadd.f32 %v48, %v69
    %v74 = vadd.f32 %v49, %v70
    %v75 = vadd.f32 %v50, %v71
    %v76 = vadd.f32 %v51, %v72
    %v77 = vld [vmem:[%s2] sm:$0xff]
    %v78 = vld [vmem:[%s2 + $0x8] sm:$0xff]
    %v79 = vld [vmem:[%s2 + $0x10] sm:$0xff]
    %v80 = vld [vmem:[%s2 + $0x18] sm:$0xff]
    %82 = vset.pattern.permute.xlu0 0
    %83 = vperm.xlu0 %82, %v77
    %v84 = vpop.permute.xlu0 %83
    %87 = vset.pattern.permute.xlu0 0
    %88 = vperm.xlu0 %87, %v78
    %v89 = vpop.permute.xlu0 %88
    %92 = vset.pattern.permute.xlu0 0
    %93 = vperm.xlu0 %92, %v79
    %v94 = vpop.permute.xlu0 %93
    %97 = vset.pattern.permute.xlu0 0
    %98 = vperm.xlu0 %97, %v80
    %v99 = vpop.permute.xlu0 %98
    %v101 = vadd.f32 %v73, %v84
    %v102 = vadd.f32 %v74, %v89
    %v103 = vadd.f32 %v75, %v94
    %v104 = vadd.f32 %v76, %v99
    %vm105 = vcmp.ge.f32.partialorder %v101, 0.0
    %vm106 = vcmp.ge.f32.partialorder %v102, 0.0
    %vm107 = vcmp.ge.f32.partialorder %v103, 0.0
    %vm108 = vcmp.ge.f32.partialorder %v104, 0.0
    %v109 = vmul.f32 %v101, 0.01
    %v110 = vmul.f32 %v102, 0.01
    %v111 = vmul.f32 %v103, 0.01
    %v112 = vmul.f32 %v104, 0.01
    %v113 = vsel %vm105, %v101, %v109
    %v114 = vsel %vm106, %v102, %v110
    %v115 = vsel %vm107, %v103, %v111
    %v116 = vsel %vm108, %v104, %v112
    %v117 = vld [vmem:[%s3] sm:$0xff]
    %v118 = vld [vmem:[%s3 + $0x8] sm:$0xff]
    %v119 = vld [vmem:[%s3 + $0x10] sm:$0xff]
    %v120 = vld [vmem:[%s3 + $0x18] sm:$0xff]
    %122 = vset.pattern.permute.xlu0 0
    %123 = vperm.xlu0 %122, %v117
    %v124 = vpop.permute.xlu0 %123
    %127 = vset.pattern.permute.xlu0 0
    %128 = vperm.xlu0 %127, %v118
    %v129 = vpop.permute.xlu0 %128
    %132 = vset.pattern.permute.xlu0 0
    %133 = vperm.xlu0 %132, %v119
    %v134 = vpop.permute.xlu0 %133
    %137 = vset.pattern.permute.xlu0 0
    %138 = vperm.xlu0 %137, %v120
    %v139 = vpop.permute.xlu0 %138
    %v141 = vmul.f32 %v113, %v124
    %v142 = vmul.f32 %v114, %v129
    %v143 = vmul.f32 %v115, %v134
    %v144 = vmul.f32 %v116, %v139
    %vm145 = vcmask 64512
    %v146 = vsel %vm145, %v141, 0.0
    %v147 = vsel %vm145, %v142, 0.0
    %v148 = vadd.f32 %v146, %v147
    %v149 = vsel %vm145, %v143, 0.0
    %v150 = vadd.f32 %v148, %v149
    %v151 = vsel %vm145, %v144, 0.0
    %v152 = vadd.f32 %v150, %v151
    %v153 = vrot.slane %v152, 4
    %v154 = vadd.f32 %v152, %v153
    %v155 = vrot.slane %v154, 2
    %v156 = vadd.f32 %v154, %v155
    %v157 = vrot.slane %v156, 1
    %v158 = vadd.f32 %v156, %v157
    %s159 = sld [smem:[#allocation2]]
    %v160 = vstv %s159
    %v161 = vadd.f32 %v158, %v160
    %vm162 = vcmask 57344
    %163 = vst.msk [vmem:[#allocation3] sm:$0x1] %vm162, %v161
    // Predicated region
    $region22: #{net_forward.1} parent=1 // pred_check
      _
    $region23: #{net_forward.1} parent=1 // pred_check_branch
      %165 = sbr.rel (0) target = $region25
    $region24: #{net_forward.1} parent=1 // pred_region
      %167 = vsyncadd [#allocation4], 0
      %s169 = sshll.u32 [#allocation3], 4
      %s170 = int_to_ptr.vmem [resolvable:$true] %s169
      %s171 = sshll.u32 %s5, 4
      %s172 = int_to_ptr.hbm [resolvable:$true] %s171
      %174 = dma.vmem_to_hbm [thread:$0]  %s170, 16, %s172, [#allocation4]
    $region25: #{net_forward.1} parent=1 // pred_fallthru
      _
    // Predicated region
    $region26: #{net_forward.1} parent=1 // pred_check
      _
    $region27: #{net_forward.1} parent=1 // pred_check_branch
      %176 = sbr.rel (0) target = $region29
    $region28: #{net_forward.1} parent=1 // pred_region
      %178 = dma.done [#allocation4], 16
    $region29: #{net_forward.1} parent=1 // pred_fallthru
      _
    %179 = vsyncpa [#allocation4], 1

</llo_original>
